<compile_context>
chip_gen: v5e
topology: v5e:2x2
jax: 0.10.0
libtpu: 0.0.40
codegen_flags: <defaults>
</compile_context>

<pallas_src>
import jax
import jax.numpy as jnp
from jax.experimental import pallas as pl
from jax.experimental.pallas import tpu as pltpu


def _tied_transpose_kernel(x_ref, w_ref, o_ref, acc_ref):
    """Computes one (bm, bn) output tile, accumulating over the contraction axis.

    x_ref:   [bm, bk]   activation tile (compute dtype)
    w_ref:   [bk, bn]   weight tile in its stored [n_latents, n_inputs] layout
    o_ref:   [bm, bn]   output tile (written once, at the last contraction step)
    acc_ref: [bm, bn]   f32 VMEM accumulator (persists across the k grid axis)
    """
    k = pl.program_id(2)

    @pl.when(k == 0)
    def _init():
        acc_ref[...] = jnp.zeros_like(acc_ref)

    acc_ref[...] += jnp.dot(x_ref[...], w_ref[...],
                            preferred_element_type=jnp.float32)

    @pl.when(k == pl.num_programs(2) - 1)
    def _finalize():
        o_ref[...] = acc_ref[...].astype(o_ref.dtype)


def tied_transpose_forward(x, weight, *, compute_dtype=None,
                           bm=256, bn=512, bk=512):
    """Pallas TiedTranspose forward: F.linear(x, weight.T, None) == x @ weight.

    x:       [..., n_latents]
    weight:  [n_latents, n_inputs]  (the wrapped nn.Linear(n_inputs, n_latents).weight,
                                     consumed as stored -- no transpose copy)
    compute_dtype: dtype streamed into the MXU (accumulation is always f32).
        None -> x.dtype.  jnp.bfloat16 halves weight HBM traffic; for production,
        store `weight` in that dtype at init time so the cast is not paid per call.
    bm/bn/bk: batch / output-feature / contraction tile sizes (capped to the
        actual dims).  Defaults are 256-multiples for v6e/v7x MXU alignment; on
        v7x shrink bn/bk if the double-buffered tiles approach the 64 MiB VMEM.
    """
    out_dtype = x.dtype
    *lead, K = x.shape
    K2, N = weight.shape
    assert K == K2, (x.shape, weight.shape)

    x2 = x.reshape(-1, K)
    B = x2.shape[0]

    if compute_dtype is None:
        compute_dtype = x.dtype
    x2 = x2.astype(compute_dtype)
    w = weight.astype(compute_dtype)

    bm = min(bm, B)
    bn = min(bn, N)
    bk = min(bk, K)
    assert B % bm == 0 and N % bn == 0 and K % bk == 0, (
        "shapes must be divisible by the tile sizes", (B, N, K), (bm, bn, bk))
    grid = (B // bm, N // bn, K // bk)   # reduction axis last

    out = pl.pallas_call(
        _tied_transpose_kernel,
        out_shape=jax.ShapeDtypeStruct((B, N), out_dtype),
        grid=grid,
        in_specs=[
            # activations: depend on (batch tile, contraction tile)
            pl.BlockSpec((bm, bk), lambda i, j, k: (i, k)),
            # weights: independent of the batch axis i -> not re-streamed per
            # batch tile; contraction over the weight's leading dim as stored.
            pl.BlockSpec((bk, bn), lambda i, j, k: (k, j)),
        ],
        # same output block for every k -> resident accumulator target
        out_specs=pl.BlockSpec((bm, bn), lambda i, j, k: (i, j)),
        scratch_shapes=[pltpu.VMEM((bm, bn), jnp.float32)],
        compiler_params=pltpu.CompilerParams(
            dimension_semantics=("parallel", "parallel", "arbitrary")),
    )(x2, w)

    return out.reshape(*lead, N)


if __name__ == "__main__":
    # Small shapes consistent with the module: linear = nn.Linear(n_inputs, n_latents),
    # TiedTranspose maps latents -> inputs.  Asymmetric dims catch orientation bugs;
    # tiles of 256 give a (1, 3, 2) grid so the pipelined/accumulated path is exercised.
    B, n_latents, n_inputs = 16, 512, 768

    key = jax.random.PRNGKey(0)
    k_x, k_w = jax.random.split(key, 2)
    x = jax.random.normal(k_x, (B, n_latents), dtype=jnp.float32)
    weight = (jax.random.normal(k_w, (n_latents, n_inputs), jnp.float32)
              / jnp.sqrt(n_latents))

    # Reference: F.linear(x, weight.T, None) == x @ weight  (bias is None by assertion)
    ref = jnp.dot(x, weight, precision=jax.lax.Precision.HIGHEST)

    # f32 path.
    y_f32 = tied_transpose_forward(x, weight, compute_dtype=jnp.float32,
                                   bm=256, bn=256, bk=256)
    # bf16-streamed path (perf feedback: halve weight HBM traffic, keep f32 accumulation).
    y_bf16 = tied_transpose_forward(x, weight, compute_dtype=jnp.bfloat16,
                                    bm=256, bn=256, bk=256)
    jax.block_until_ready((y_f32, y_bf16))

    assert y_f32.shape == (B, n_inputs) and y_bf16.shape == (B, n_inputs)
    assert jnp.allclose(y_f32, ref, atol=1e-3, rtol=1e-3), \
        float(jnp.max(jnp.abs(y_f32 - ref)))
    assert jnp.allclose(y_bf16, ref, atol=5e-2, rtol=5e-2), \
        float(jnp.max(jnp.abs(y_bf16 - ref)))

    # TODO(synk): the module's `weight` / `bias` properties are pure Python
    # attribute accessors (bias is None by construction); nothing to lower.
    print("KERNEL_OK")
</pallas_src>

<mosaic_0001>
module attributes {stable_mosaic.version = 11 : i64} {
  func.func @_tied_transpose_kernel(%arg0: i32, %arg1: i32, %arg2: i32, %arg3: memref<16x256xf32, #tpu.memory_space<vmem>>, %arg4: memref<256x256xf32, #tpu.memory_space<vmem>>, %arg5: memref<16x256xf32, #tpu.memory_space<vmem>>, %arg6: memref<16x256xf32, #tpu.memory_space<vmem>>) attributes {dimension_semantics = [#tpu.dimension_semantics<parallel>, #tpu.dimension_semantics<parallel>, #tpu.dimension_semantics<arbitrary>], iteration_bounds = array<i64: 1, 3, 2>, scalar_prefetch = 0 : i64, scratch_operands = 1 : i64, tpu.core_type = #tpu.core_type<tc>, window_params = [{transform_indices = @transform_0, window_bounds = array<i64: 16, 256>}, {transform_indices = @transform_1, window_bounds = array<i64: 256, 256>}, {transform_indices = @transform_2, window_bounds = array<i64: 16, 256>}]} {
    %c0_i32 = arith.constant 0 : i32
    %0 = arith.cmpi eq, %arg2, %c0_i32 : i32
    %1 = arith.extui %0 : i1 to i32
    %c0_i32_0 = arith.constant 0 : i32
    %2 = arith.cmpi ne, %1, %c0_i32_0 : i32
    scf.if %2 {
      %cst_9 = arith.constant 0.000000e+00 : f32
      %12 = vector.broadcast %cst_9 : f32 to vector<16x256xf32>
      %c0_10 = arith.constant 0 : index
      %c0_11 = arith.constant 0 : index
      %13 = vector.load %arg6[%c0_10, %c0_11] : memref<16x256xf32, #tpu.memory_space<vmem>>, vector<16x256xf32>
      tpu.vector_store %arg6[%c0_10, %c0_11], %12 {strides = array<i32>} : memref<16x256xf32, #tpu.memory_space<vmem>>, vector<16x256xf32>,
    } else {
    }
    %c0 = arith.constant 0 : index
    %c0_1 = arith.constant 0 : index
    %3 = vector.load %arg6[%c0, %c0_1] : memref<16x256xf32, #tpu.memory_space<vmem>>, vector<16x256xf32>
    %c0_2 = arith.constant 0 : index
    %c0_3 = arith.constant 0 : index
    %4 = vector.load %arg3[%c0_2, %c0_3] : memref<16x256xf32, #tpu.memory_space<vmem>>, vector<16x256xf32>
    %c0_4 = arith.constant 0 : index
    %c0_5 = arith.constant 0 : index
    %5 = vector.load %arg4[%c0_4, %c0_5] : memref<256x256xf32, #tpu.memory_space<vmem>>, vector<256x256xf32>
    %cst = arith.constant dense<0.000000e+00> : vector<16x256xf32>
    %6 = tpu.matmul %4, %5, %cst {dimension_numbers = #tpu.dot_dimension_numbers<[1], [0], [0], [1], [0, 0, 1, 1], [], []>} : vector<16x256xf32>, vector<256x256xf32>, vector<16x256xf32> -> vector<16x256xf32>
    %7 = arith.addf %3, %6 : vector<16x256xf32>
    %c0_6 = arith.constant 0 : index
    %c0_7 = arith.constant 0 : index
    %8 = vector.load %arg6[%c0_6, %c0_7] : memref<16x256xf32, #tpu.memory_space<vmem>>, vector<16x256xf32>
    tpu.vector_store %arg6[%c0_6, %c0_7], %7 {strides = array<i32>} : memref<16x256xf32, #tpu.memory_space<vmem>>, vector<16x256xf32>,
    %c1_i32 = arith.constant 1 : i32
    %9 = arith.cmpi eq, %arg2, %c1_i32 : i32
    %10 = arith.extui %9 : i1 to i32
    %c0_i32_8 = arith.constant 0 : i32
    %11 = arith.cmpi ne, %10, %c0_i32_8 : i32
    scf.if %11 {
      %c0_9 = arith.constant 0 : index
      %c0_10 = arith.constant 0 : index
      %12 = vector.load %arg6[%c0_9, %c0_10] : memref<16x256xf32, #tpu.memory_space<vmem>>, vector<16x256xf32>
      %c0_11 = arith.constant 0 : index
      %c0_12 = arith.constant 0 : index
      %13 = vector.load %arg5[%c0_11, %c0_12] : memref<16x256xf32, #tpu.memory_space<vmem>>, vector<16x256xf32>
      tpu.vector_store %arg5[%c0_11, %c0_12], %12 {strides = array<i32>} : memref<16x256xf32, #tpu.memory_space<vmem>>, vector<16x256xf32>,
    } else {
    }
    return
  }
  func.func @transform_0(%arg0: i32, %arg1: i32, %arg2: i32) -> (i32, i32) {
    %c0_i32 = arith.constant 0 : i32
    return %arg0, %arg2 : i32, i32
  }
  func.func @transform_1(%arg0: i32, %arg1: i32, %arg2: i32) -> (i32, i32) {
    %c0_i32 = arith.constant 0 : i32
    return %arg2, %arg1 : i32, i32
  }
  func.func @transform_2(%arg0: i32, %arg1: i32, %arg2: i32) -> (i32, i32) {
    %c0_i32 = arith.constant 0 : i32
    return %arg0, %arg1 : i32, i32
  }
}

</mosaic_0001>

<llo_original>
// kernel: tpu_custom_call.1
$region0: #{tpu_custom_call.1}
  #allocation0 [shape = 'u32[]', space=smem, size = 0x4, offset = 0x4, fixed_abs, tag = 'smem constant byte address 0x4 - core index']
  #allocation1 [shape = 'u32[72,128]{1,0:T(1,128)}', space=vmem, size = 0x9000, scoped, tag = 'internal scratch']
  #allocation2 [shape = 'f32[16,256]{1,0:T(8,128)}', space=vmem, size = 0x4000, scoped, tag = 'scratch operand']
  %s0 = inlined_call_operand.hbm [shape: f32[16,512], index: 0, kind: input, shape index: {}]
  %s1 = inlined_call_operand.hbm [shape: f32[512,768], index: 1, kind: input, shape index: {}]
  %s2 = inlined_call_operand.hbm [shape: f32[16,768], index: 2, kind: output, shape index: {}]
  %s3 = sld [smem:[#allocation0]]
  $region57: #{tpu_custom_call.1} parent=0
    _
  %s5 = ssub.s32 1, %s3
  %s6 = scalar_select 0, %s5, %s3
  $region1: #{tpu_custom_call.1} parent=0
    #allocation3 [shape = 'u8[32768]{0}', space=vmem, size = 0x8000, scoped, tag = 'input window, operand 0']
    #allocation4 [shape = 's32[2]{0}', space=sflag, size = 0x8, scoped, tag = 'scoped memory for tpu_custom_call.1']
    #allocation5 [shape = 's32[2]{0}', space=sflag, size = 0x8, scoped, tag = 'scoped memory for tpu_custom_call.1']
    #allocation6 [shape = 'u8[524288]{0}', space=vmem, size = 0x80000, scoped, tag = 'input window, operand 1']
    #allocation7 [shape = 's32[2]{0}', space=sflag, size = 0x8, scoped, tag = 'scoped memory for tpu_custom_call.1']
    #allocation8 [shape = 'u8[32768]{0}', space=vmem, size = 0x8000, scoped, tag = 'output window, operand 0']
    %7 = vsyncpa [#allocation4], 0
    %s8 = scalar_lea.sflag [#allocation4], 1
    %9 = vsyncpa %s8, 0
    %10 = vsyncpa [#allocation7], 0
    %s11 = scalar_lea.sflag [#allocation7], 1
    %12 = vsyncpa %s11, 0
    %13 = vsyncpa [#allocation5], 0
    %s14 = scalar_lea.sflag [#allocation5], 1
    %15 = vsyncpa %s14, 0
    loop: start=0, step=1, limit=8
    $region2: #{tpu_custom_call.1} parent=1 // loop_pre_header
      _
    $region3: #{tpu_custom_call.1} parent=1 // loop_header
      %s17 = sphi 0, %s21
      %p18 = scmp.ge.s32.totalorder %s17, 8
      %s24 = sphi 0, %s43
      %s25 = sphi 0, %s39
      %s26 = sphi 0, %s35
      %s27 = sphi 0, %s24
      %s28 = sphi 0, %s25
      %s29 = sphi 0, %s26
      %s30 = sphi 0, %s27
      %s31 = sphi 0, %s28
      %s32 = sphi 0, %s29
      %s48 = sphi 0, %s50
      %s51 = sphi 0, %s48
      %s52 = sphi 0, %s51
      %s68 = sphi 0, %s52
      %s76 = sphi 0, %s78
      %s79 = sphi 0, %s76
      %s80 = sphi 0, %s79
      %s96 = sphi 0, %s80
      %s104 = sphi 0, %s106
      %s107 = sphi 0, %s104
      %s108 = sphi 0, %s107
      %s124 = sphi 0, %s108
    $region4: #{tpu_custom_call.1} parent=1 // loop_header_branch
      %20 = sbr.rel (%p18) target = $region8
    $region5: #{tpu_custom_call.1} parent=1 // loop_body
      %s22 = ssub.s32 %s17, 1
      %s23 = ssub.s32 %s17, 2
      %s33 = sadd.s32 1, %s26
      %p34 = scmp.ge.s32.totalorder %s33, 2
      %s35 = scalar_select %p34, 0, %s33
      %s36 = sadd.s32 1, %s25
      %s37 = scalar_select %p34, %s36, %s25
      %p38 = scmp.ge.s32.totalorder %s37, 3
      %s39 = scalar_select %p38, 0, %s37
      %s40 = sadd.s32 1, %s24
      %s41 = scalar_select %p38, %s40, %s24
      %p42 = scmp.ge.s32.totalorder %s41, 1
      %s43 = scalar_select %p42, 0, %s41
      %s44 = ssub.s32 %s24, %s43
      %s45 = ssub.s32 %s26, %s35
      %s46 = sor.u32 %s44, %s45
      %p47 = scmp.eq.s32.totalorder %s46, 0
      %s49 = sadd.s32 %s48, 1
      %s50 = scalar_select %p47, %s48, %s49
      %p53 = pneg %p47
      %p54 = scmp.eq.s32.totalorder %s17, 5
      %p55 = por %p53, %p54
      %p56 = scmp.ne.s32.totalorder %s48, %s51
      %p57 = scmp.eq.s32.totalorder %s17, 0
      %p58 = por %p56, %p57
      %p59 = scmp.ne.s32.totalorder %s48, %s51
      %p60 = scmp.eq.s32.totalorder %s22, 5
      %p61 = por %p59, %p60
      %p62 = scmp.ne.s32.totalorder %s51, %s52
      %p63 = scmp.eq.s32.totalorder %s22, 0
      %p64 = por %p62, %p63
      %p65 = scmp.ne.s32.totalorder %s51, %s52
      %p66 = scmp.eq.s32.totalorder %s23, 5
      %p67 = por %p65, %p66
      %p69 = scmp.ne.s32.totalorder %s52, %s68
      %p70 = scmp.eq.s32.totalorder %s23, 0
      %p71 = por %p69, %p70
      %s72 = ssub.s32 %s26, %s35
      %s73 = ssub.s32 %s25, %s39
      %s74 = sor.u32 %s72, %s73
      %p75 = scmp.eq.s32.totalorder %s74, 0
      %s77 = sadd.s32 %s76, 1
      %s78 = scalar_select %p75, %s76, %s77
      %p81 = pneg %p75
      %p82 = scmp.eq.s32.totalorder %s17, 5
      %p83 = por %p81, %p82
      %p84 = scmp.ne.s32.totalorder %s76, %s79
      %p85 = scmp.eq.s32.totalorder %s17, 0
      %p86 = por %p84, %p85
      %p87 = scmp.ne.s32.totalorder %s76, %s79
      %p88 = scmp.eq.s32.totalorder %s22, 5
      %p89 = por %p87, %p88
      %p90 = scmp.ne.s32.totalorder %s79, %s80
      %p91 = scmp.eq.s32.totalorder %s22, 0
      %p92 = por %p90, %p91
      %p93 = scmp.ne.s32.totalorder %s79, %s80
      %p94 = scmp.eq.s32.totalorder %s23, 5
      %p95 = por %p93, %p94
      %p97 = scmp.ne.s32.totalorder %s80, %s96
      %p98 = scmp.eq.s32.totalorder %s23, 0
      %p99 = por %p97, %p98
      %s100 = ssub.s32 %s24, %s43
      %s101 = ssub.s32 %s25, %s39
      %s102 = sor.u32 %s100, %s101
      %p103 = scmp.eq.s32.totalorder %s102, 0
      %s105 = sadd.s32 %s104, 1
      %s106 = scalar_select %p103, %s104, %s105
      %p109 = pneg %p103
      %p110 = scmp.eq.s32.totalorder %s17, 5
      %p111 = por %p109, %p110
      %p112 = scmp.ne.s32.totalorder %s104, %s107
      %p113 = scmp.eq.s32.totalorder %s17, 0
      %p114 = por %p112, %p113
      %p115 = scmp.ne.s32.totalorder %s104, %s107
      %p116 = scmp.eq.s32.totalorder %s22, 5
      %p117 = por %p115, %p116
      %p118 = scmp.ne.s32.totalorder %s107, %s108
      %p119 = scmp.eq.s32.totalorder %s22, 0
      %p120 = por %p118, %p119
      %p121 = scmp.ne.s32.totalorder %s107, %s108
      %p122 = scmp.eq.s32.totalorder %s23, 5
      %p123 = por %p121, %p122
      %p125 = scmp.ne.s32.totalorder %s108, %s124
      %p126 = scmp.eq.s32.totalorder %s23, 0
      %p127 = por %p125, %p126
      %p128 = scmp.le.s32.totalorder 1, %s17
      %p129 = scmp.lt.s32.totalorder %s17, 7
      %p130 = pnand %p128, %p129
      %p131 = pneg %p130
      // Predicated region
      $region9: #{tpu_custom_call.1} parent=5 // pred_check
        _
      $region10: #{tpu_custom_call.1} parent=5 // pred_check_branch
        %133 = sbr.rel (%p130) target = $region12
      $region11: #{tpu_custom_call.1} parent=5 // pred_region
        %s134 = ssub.s32 %s17, 1
      $region12: #{tpu_custom_call.1} parent=5 // pred_fallthru
        _
      %p135 = scmp.lt.s32.totalorder %s17, 6
      // Predicated region
      $region13: #{tpu_custom_call.1} parent=5 // pred_check
        %p136 = pneg %p135
      $region14: #{tpu_custom_call.1} parent=5 // pred_check_branch
        %138 = sbr.rel (%p136) target = $region16
      $region15: #{tpu_custom_call.1} parent=5 // pred_region
        // Predicated region
        $region17: #{tpu_custom_call.1} parent=15 // pred_check
          %p139 = pneg %p58
        $region18: #{tpu_custom_call.1} parent=15 // pred_check_branch
          %141 = sbr.rel (%p139) target = $region20
        $region19: #{tpu_custom_call.1} parent=15 // pred_region
          %s142 = sand.u32 %s48, 1
          %s143 = scalar_lea.sflag [#allocation4], %s142
          %s144 = sand.u32 %s48, 1
          %s145 = smul.addr %s144, 32
          %s146 = scalar_lea.vmem [#allocation3], %s145
          %s147 = smul.u32 2, %s24
          %s148 = smul.u32 2, %s26
          %150 = vsyncadd %s143, 0
          %s151 = smul.addr %s147, 4
          %s152 = sadd.s32 %s148, %s151
          %s153 = smul.addr %s152, 8
          %s154 = scalar_lea.hbm %s0, %s153
          %s155 = sshll.u32 %s154, 4
          %s156 = int_to_ptr.hbm [resolvable:$true] %s155
          %s157 = sshll.u32 %s146, 4
          %s158 = int_to_ptr.vmem [resolvable:$true] %s157
          %163 = dma.hbm_to_vmem [thread:$0]  %s156, 512, %s158, %s143, 512, 256, 16
        $region20: #{tpu_custom_call.1} parent=15 // pred_fallthru
          _
        // Predicated region
        $region21: #{tpu_custom_call.1} parent=15 // pred_check
          %p164 = pneg %p86
        $region22: #{tpu_custom_call.1} parent=15 // pred_check_branch
          %166 = sbr.rel (%p164) target = $region24
        $region23: #{tpu_custom_call.1} parent=15 // pred_region
          %s167 = sand.u32 %s76, 1
          %s168 = scalar_lea.sflag [#allocation7], %s167
          %s169 = sand.u32 %s76, 1
          %s170 = smul.addr %s169, 512
          %s171 = scalar_lea.vmem [#allocation6], %s170
          %s172 = smul.u32 32, %s26
          %s173 = smul.u32 2, %s25
          %175 = vsyncadd %s168, 0
          %s176 = smul.addr %s172, 6
          %s177 = sadd.s32 %s173, %s176
          %s178 = smul.addr %s177, 8
          %s179 = scalar_lea.hbm %s1, %s178
          %s180 = sshll.u32 %s179, 4
          %s181 = int_to_ptr.hbm [resolvable:$true] %s180
          %s182 = sshll.u32 %s171, 4
          %s183 = int_to_ptr.vmem [resolvable:$true] %s182
          %188 = dma.hbm_to_vmem [thread:$0]  %s181, 8192, %s183, %s168, 768, 256, 16
        $region24: #{tpu_custom_call.1} parent=15 // pred_fallthru
          _
      $region16: #{tpu_custom_call.1} parent=5 // pred_fallthru
        _
      %p189 = scmp.le.s32.totalorder 1, %s17
      %p190 = scmp.lt.s32.totalorder %s17, 7
      %p191 = pnand %p189, %p190
      %p192 = pneg %p191
      // Predicated region
      $region25: #{tpu_custom_call.1} parent=5 // pred_check
        _
      $region26: #{tpu_custom_call.1} parent=5 // pred_check_branch
        %194 = sbr.rel (%p191) target = $region28
      $region27: #{tpu_custom_call.1} parent=5 // pred_region
        %s195 = ssub.s32 %s17, 1
        %s196 = sand.u32 %s51, 1
        %s197 = scalar_lea.sflag [#allocation4], %s196
        %s198 = sand.u32 %s51, 1
        %s199 = smul.addr %s198, 32
        %s200 = scalar_lea.vmem [#allocation3], %s199
        // Predicated region
        $region29: #{tpu_custom_call.1} parent=27 // pred_check
          %p201 = pneg %p64
        $region30: #{tpu_custom_call.1} parent=27 // pred_check_branch
          %203 = sbr.rel (%p201) target = $region32
        $region31: #{tpu_custom_call.1} parent=27 // pred_region
          %205 = dma.done %s197, 512
        $region32: #{tpu_custom_call.1} parent=27 // pred_fallthru
          _
        %s206 = sand.u32 %s79, 1
        %s207 = scalar_lea.sflag [#allocation7], %s206
        %s208 = sand.u32 %s79, 1
        %s209 = smul.addr %s208, 512
        %s210 = scalar_lea.vmem [#allocation6], %s209
        // Predicated region
        $region33: #{tpu_custom_call.1} parent=27 // pred_check
          %p211 = pneg %p92
        $region34: #{tpu_custom_call.1} parent=27 // pred_check_branch
          %213 = sbr.rel (%p211) target = $region36
        $region35: #{tpu_custom_call.1} parent=27 // pred_region
          %215 = dma.done %s207, 8192
        $region36: #{tpu_custom_call.1} parent=27 // pred_fallthru
          _
        %s216 = sand.u32 %s51, 1
        %s217 = scalar_lea.sflag [#allocation4], %s216
        %s218 = sand.u32 %s51, 1
        %s219 = smul.addr %s218, 32
        %s220 = scalar_lea.vmem [#allocation3], %s219
        %p221 = pneg %p64
        %p222 = pneg %p61
        %s223 = sand.u32 %s79, 1
        %s224 = scalar_lea.sflag [#allocation7], %s223
        %s225 = sand.u32 %s79, 1
        %s226 = smul.addr %s225, 512
        %s227 = scalar_lea.vmem [#allocation6], %s226
        %p228 = pneg %p92
        %p229 = pneg %p89
        %p230 = pneg %p120
        %p231 = pneg %p117
        %s232 = sand.u32 %s107, 1
        %s233 = scalar_lea.sflag [#allocation5], %s232
        %s234 = sand.u32 %s107, 1
        %s235 = smul.addr %s234, 32
        %s236 = scalar_lea.vmem [#allocation8], %s235
        %s237 = smul.u32 2, %s27
        %s238 = smul.u32 2, %s29
        %s239 = smul.u32 32, %s29
        %s240 = smul.u32 2, %s28
        %s241 = smul.u32 2, %s27
        %s242 = smul.u32 2, %s28
        %p243 = scmp.eq.s32.totalorder %s29, 0
        // Predicated region
        $region37: #{tpu_custom_call.1} parent=27 // pred_check
          %p244 = pneg %p243
        $region38: #{tpu_custom_call.1} parent=27 // pred_check_branch
          %246 = sbr.rel (%p244) target = $region40
        $region39: #{tpu_custom_call.1} parent=27 // pred_region
          %247 = vst [vmem:[#allocation2] sm:$0xff] 0.0
          %248 = vst [vmem:[#allocation2 + $0x8] sm:$0xff] 0.0
          %249 = vst [vmem:[#allocation2 + $0x10] sm:$0xff] 0.0
          %250 = vst [vmem:[#allocation2 + $0x18] sm:$0xff] 0.0
        $region40: #{tpu_custom_call.1} parent=27 // pred_fallthru
          _
        %v251 = vld [vmem:[#allocation2] sm:$0xff]
        %v252 = vld [vmem:[#allocation2 + $0x8] sm:$0xff]
        %v253 = vld [vmem:[#allocation2 + $0x10] sm:$0xff]
        %v254 = vld [vmem:[#allocation2 + $0x18] sm:$0xff]
        %v255 = vld [vmem:[%s200] sm:$0xff]
        %v256 = vld [vmem:[%s200 + $0x8] sm:$0xff]
        %v257 = vld [vmem:[%s200 + $0x10] sm:$0xff]
        %v258 = vld [vmem:[%s200 + $0x18] sm:$0xff]
        %v259 = vld [vmem:[%s210] sm:$0xff]
        %v260 = vld [vmem:[%s210 + $0x8] sm:$0xff]
        %v261 = vld [vmem:[%s210 + $0x10] sm:$0xff]
        %v262 = vld [vmem:[%s210 + $0x18] sm:$0xff]
        %v263 = vld [vmem:[%s210 + $0x20] sm:$0xff]
        %v264 = vld [vmem:[%s210 + $0x28] sm:$0xff]
        %v265 = vld [vmem:[%s210 + $0x30] sm:$0xff]
        %v266 = vld [vmem:[%s210 + $0x38] sm:$0xff]
        %v267 = vld [vmem:[%s210 + $0x40] sm:$0xff]
        %v268 = vld [vmem:[%s210 + $0x48] sm:$0xff]
        %v269 = vld [vmem:[%s210 + $0x50] sm:$0xff]
        %v270 = vld [vmem:[%s210 + $0x58] sm:$0xff]
        %v271 = vld [vmem:[%s210 + $0x60] sm:$0xff]
        %v272 = vld [vmem:[%s210 + $0x68] sm:$0xff]
        %v273 = vld [vmem:[%s210 + $0x70] sm:$0xff]
        %v274 = vld [vmem:[%s210 + $0x78] sm:$0xff]
        %v275 = vld [vmem:[%s210 + $0x80] sm:$0xff]
        %v276 = vld [vmem:[%s210 + $0x88] sm:$0xff]
        %v277 = vld [vmem:[%s210 + $0x90] sm:$0xff]
        %v278 = vld [vmem:[%s210 + $0x98] sm:$0xff]
        %v279 = vld [vmem:[%s210 + $0xa0] sm:$0xff]
        %v280 = vld [vmem:[%s210 + $0xa8] sm:$0xff]
        %v281 = vld [vmem:[%s210 + $0xb0] sm:$0xff]
        %v282 = vld [vmem:[%s210 + $0xb8] sm:$0xff]
        %v283 = vld [vmem:[%s210 + $0xc0] sm:$0xff]
        %v284 = vld [vmem:[%s210 + $0xc8] sm:$0xff]
        %v285 = vld [vmem:[%s210 + $0xd0] sm:$0xff]
        %v286 = vld [vmem:[%s210 + $0xd8] sm:$0xff]
        %v287 = vld [vmem:[%s210 + $0xe0] sm:$0xff]
        %v288 = vld [vmem:[%s210 + $0xe8] sm:$0xff]
        %v289 = vld [vmem:[%s210 + $0xf0] sm:$0xff]
        %v290 = vld [vmem:[%s210 + $0xf8] sm:$0xff]
        %v291 = vld [vmem:[%s210 + $0x100] sm:$0xff]
        %v292 = vld [vmem:[%s210 + $0x108] sm:$0xff]
        %v293 = vld [vmem:[%s210 + $0x110] sm:$0xff]
        %v294 = vld [vmem:[%s210 + $0x118] sm:$0xff]
        %v295 = vld [vmem:[%s210 + $0x120] sm:$0xff]
        %v296 = vld [vmem:[%s210 + $0x128] sm:$0xff]
        %v297 = vld [vmem:[%s210 + $0x130] sm:$0xff]
        %v298 = vld [vmem:[%s210 + $0x138] sm:$0xff]
        %v299 = vld [vmem:[%s210 + $0x140] sm:$0xff]
        %v300 = vld [vmem:[%s210 + $0x148] sm:$0xff]
        %v301 = vld [vmem:[%s210 + $0x150] sm:$0xff]
        %v302 = vld [vmem:[%s210 + $0x158] sm:$0xff]
        %v303 = vld [vmem:[%s210 + $0x160] sm:$0xff]
        %v304 = vld [vmem:[%s210 + $0x168] sm:$0xff]
        %v305 = vld [vmem:[%s210 + $0x170] sm:$0xff]
        %v306 = vld [vmem:[%s210 + $0x178] sm:$0xff]
        %v307 = vld [vmem:[%s210 + $0x180] sm:$0xff]
        %v308 = vld [vmem:[%s210 + $0x188] sm:$0xff]
        %v309 = vld [vmem:[%s210 + $0x190] sm:$0xff]
        %v310 = vld [vmem:[%s210 + $0x198] sm:$0xff]
        %v311 = vld [vmem:[%s210 + $0x1a0] sm:$0xff]
        %v312 = vld [vmem:[%s210 + $0x1a8] sm:$0xff]
        %v313 = vld [vmem:[%s210 + $0x1b0] sm:$0xff]
        %v314 = vld [vmem:[%s210 + $0x1b8] sm:$0xff]
        %v315 = vld [vmem:[%s210 + $0x1c0] sm:$0xff]
        %v316 = vld [vmem:[%s210 + $0x1c8] sm:$0xff]
        %v317 = vld [vmem:[%s210 + $0x1d0] sm:$0xff]
        %v318 = vld [vmem:[%s210 + $0x1d8] sm:$0xff]
        %v319 = vld [vmem:[%s210 + $0x1e0] sm:$0xff]
        %v320 = vld [vmem:[%s210 + $0x1e8] sm:$0xff]
        %v321 = vld [vmem:[%s210 + $0x1f0] sm:$0xff]
        %v322 = vld [vmem:[%s210 + $0x1f8] sm:$0xff]
        %323 = vmatpush.msra.mxu0 %v289
        %324 = vmatpush.msra.mxu0 %v287
        %325 = vmatpush.msra.mxu0 %v285
        %326 = vmatpush.msra.mxu0 %v283
        %327 = vmatpush.msra.mxu0 %v281
        %328 = vmatpush.msra.mxu0 %v279
        %329 = vmatpush.msra.mxu0 %v277
        %330 = vmatpush.msra.mxu0 %v275
        %331 = vmatpush.msra.mxu0 %v273
        %332 = vmatpush.msra.mxu0 %v271
        %333 = vmatpush.msra.mxu0 %v269
        %334 = vmatpush.msra.mxu0 %v267
        %335 = vmatpush.msra.mxu0 %v265
        %336 = vmatpush.msra.mxu0 %v263
        %337 = vmatpush.msra.mxu0 %v261
        %338 = vmatpush.msra.mxu0 %v259
        %339 = vmatmul.f32.gmra.mxu0 %v255
        %v340 = vpop.f32.mrf.mxu0
        %v341 = vadd.f32 0.0, %v340
        %342 = vmatmul.f32.gmra.mxu0 %v257
        %v343 = vpop.f32.mrf.mxu0
        %v344 = vadd.f32 0.0, %v343
        %345 = vdwg.mxu0
        %346 = vmatpush.msra.mxu0 %v321
        %347 = vmatpush.msra.mxu0 %v319
        %348 = vmatpush.msra.mxu0 %v317
        %349 = vmatpush.msra.mxu0 %v315
        %350 = vmatpush.msra.mxu0 %v313
        %351 = vmatpush.msra.mxu0 %v311
        %352 = vmatpush.msra.mxu0 %v309
        %353 = vmatpush.msra.mxu0 %v307
        %354 = vmatpush.msra.mxu0 %v305
        %355 = vmatpush.msra.mxu0 %v303
        %356 = vmatpush.msra.mxu0 %v301
        %357 = vmatpush.msra.mxu0 %v299
        %358 = vmatpush.msra.mxu0 %v297
        %359 = vmatpush.msra.mxu0 %v295
        %360 = vmatpush.msra.mxu0 %v293
        %361 = vmatpush.msra.mxu0 %v291
        %362 = vmatmul.f32.gmra.mxu0 %v256
        %v363 = vpop.f32.mrf.mxu0
        %v364 = vadd.f32 %v341, %v363
        %365 = vmatmul.f32.gmra.mxu0 %v258
        %v366 = vpop.f32.mrf.mxu0
        %v367 = vadd.f32 %v344, %v366
        %368 = vdwg.mxu0
        %369 = vmatpush.msra.mxu0 %v290
        %370 = vmatpush.msra.mxu0 %v288
        %371 = vmatpush.msra.mxu0 %v286
        %372 = vmatpush.msra.mxu0 %v284
        %373 = vmatpush.msra.mxu0 %v282
        %374 = vmatpush.msra.mxu0 %v280
        %375 = vmatpush.msra.mxu0 %v278
        %376 = vmatpush.msra.mxu0 %v276
        %377 = vmatpush.msra.mxu0 %v274
        %378 = vmatpush.msra.mxu0 %v272
        %379 = vmatpush.msra.mxu0 %v270
        %380 = vmatpush.msra.mxu0 %v268
        %381 = vmatpush.msra.mxu0 %v266
        %382 = vmatpush.msra.mxu0 %v264
        %383 = vmatpush.msra.mxu0 %v262
        %384 = vmatpush.msra.mxu0 %v260
        %385 = vmatmul.f32.gmra.mxu0 %v255
        %v386 = vpop.f32.mrf.mxu0
        %v387 = vadd.f32 0.0, %v386
        %388 = vmatmul.f32.gmra.mxu0 %v257
        %v389 = vpop.f32.mrf.mxu0
        %v390 = vadd.f32 0.0, %v389
        %391 = vdwg.mxu0
        %392 = vmatpush.msra.mxu0 %v322
        %393 = vmatpush.msra.mxu0 %v320
        %394 = vmatpush.msra.mxu0 %v318
        %395 = vmatpush.msra.mxu0 %v316
        %396 = vmatpush.msra.mxu0 %v314
        %397 = vmatpush.msra.mxu0 %v312
        %398 = vmatpush.msra.mxu0 %v310
        %399 = vmatpush.msra.mxu0 %v308
        %400 = vmatpush.msra.mxu0 %v306
        %401 = vmatpush.msra.mxu0 %v304
        %402 = vmatpush.msra.mxu0 %v302
        %403 = vmatpush.msra.mxu0 %v300
        %404 = vmatpush.msra.mxu0 %v298
        %405 = vmatpush.msra.mxu0 %v296
        %406 = vmatpush.msra.mxu0 %v294
        %407 = vmatpush.msra.mxu0 %v292
        %408 = vmatmul.f32.gmra.mxu0 %v256
        %v409 = vpop.f32.mrf.mxu0
        %v410 = vadd.f32 %v387, %v409
        %411 = vmatmul.f32.gmra.mxu0 %v258
        %v412 = vpop.f32.mrf.mxu0
        %v413 = vadd.f32 %v390, %v412
        %414 = vdwg.mxu0
        %v415 = vadd.f32 %v251, %v364
        %v416 = vadd.f32 %v252, %v410
        %v417 = vadd.f32 %v253, %v367
        %v418 = vadd.f32 %v254, %v413
        %419 = vst [vmem:[#allocation2] sm:$0xff] %v415
        %420 = vst [vmem:[#allocation2 + $0x8] sm:$0xff] %v416
        %421 = vst [vmem:[#allocation2 + $0x10] sm:$0xff] %v417
        %422 = vst [vmem:[#allocation2 + $0x18] sm:$0xff] %v418
        %p423 = scmp.eq.s32.totalorder %s29, 1
        // Predicated region
        $region41: #{tpu_custom_call.1} parent=27 // pred_check
          %p424 = pneg %p423
        $region42: #{tpu_custom_call.1} parent=27 // pred_check_branch
          %426 = sbr.rel (%p424) target = $region44
        $region43: #{tpu_custom_call.1} parent=27 // pred_region
          %v427 = vld [vmem:[#allocation2] sm:$0xff]
          %v428 = vld [vmem:[#allocation2 + $0x8] sm:$0xff]
          %v429 = vld [vmem:[#allocation2 + $0x10] sm:$0xff]
          %v430 = vld [vmem:[#allocation2 + $0x18] sm:$0xff]
          %431 = vst [vmem:[%s236] sm:$0xff] %v427
          %432 = vst [vmem:[%s236 + $0x8] sm:$0xff] %v428
          %433 = vst [vmem:[%s236 + $0x10] sm:$0xff] %v429
          %434 = vst [vmem:[%s236 + $0x18] sm:$0xff] %v430
        $region44: #{tpu_custom_call.1} parent=27 // pred_fallthru
          _
        %s435 = sand.u32 %s107, 1
        %s436 = scalar_lea.sflag [#allocation5], %s435
        %s437 = sand.u32 %s107, 1
        %s438 = smul.addr %s437, 32
        %s439 = scalar_lea.vmem [#allocation8], %s438
        // Predicated region
        $region45: #{tpu_custom_call.1} parent=27 // pred_check
          %p440 = pneg %p117
        $region46: #{tpu_custom_call.1} parent=27 // pred_check_branch
          %442 = sbr.rel (%p440) target = $region48
        $region47: #{tpu_custom_call.1} parent=27 // pred_region
          %s443 = smul.u32 2, %s27
          %s444 = smul.u32 2, %s28
          %446 = vsyncadd %s436, 0
          %s447 = smul.addr %s443, 6
          %s448 = sadd.s32 %s444, %s447
          %s449 = smul.addr %s448, 8
          %s450 = scalar_lea.hbm %s2, %s449
          %s451 = sshll.u32 %s439, 4
          %s452 = int_to_ptr.vmem [resolvable:$true] %s451
          %s453 = sshll.u32 %s450, 4
          %s454 = int_to_ptr.hbm [resolvable:$true] %s453
          %459 = dma.vmem_to_hbm [thread:$0]  %s452, 512, %s454, %s436, 256, 768, 16
        $region48: #{tpu_custom_call.1} parent=27 // pred_fallthru
          _
      $region28: #{tpu_custom_call.1} parent=5 // pred_fallthru
        _
      %p460 = scmp.le.s32.totalorder 2, %s17
      // Predicated region
      $region49: #{tpu_custom_call.1} parent=5 // pred_check
        %p461 = pneg %p460
      $region50: #{tpu_custom_call.1} parent=5 // pred_check_branch
        %463 = sbr.rel (%p461) target = $region52
      $region51: #{tpu_custom_call.1} parent=5 // pred_region
        %s464 = ssub.s32 %s17, 2
        // Predicated region
        $region53: #{tpu_custom_call.1} parent=51 // pred_check
          %p465 = pneg %p123
        $region54: #{tpu_custom_call.1} parent=51 // pred_check_branch
          %467 = sbr.rel (%p465) target = $region56
        $region55: #{tpu_custom_call.1} parent=51 // pred_region
          %s468 = sand.u32 %s108, 1
          %s469 = scalar_lea.sflag [#allocation5], %s468
          %s470 = sand.u32 %s108, 1
          %s471 = smul.addr %s470, 32
          %s472 = scalar_lea.vmem [#allocation8], %s471
          %474 = dma.done %s469, 512
        $region56: #{tpu_custom_call.1} parent=51 // pred_fallthru
          _
      $region52: #{tpu_custom_call.1} parent=5 // pred_fallthru
        _
    $region6: #{tpu_custom_call.1} parent=1 // loop_footer
      %s21 = sadd.s32 1, %s17
    $region7: #{tpu_custom_call.1} parent=1 // loop_footer_branch
      %16 = sbr.rel target = $region3
    $region8: #{tpu_custom_call.1} parent=1 // loop_exit
      _
    %475 = vsyncpa [#allocation4], 1
    %s476 = scalar_lea.sflag [#allocation4], 1
    %477 = vsyncpa %s476, 1
    %478 = vsyncpa [#allocation7], 1
    %s479 = scalar_lea.sflag [#allocation7], 1
    %480 = vsyncpa %s479, 1
    %481 = vsyncpa [#allocation5], 1
    %s482 = scalar_lea.sflag [#allocation5], 1
    %483 = vsyncpa %s482, 1

</llo_original>
